<compile_context>
chip_gen: v7x
topology: tpu7x:2x2x1
jax: 0.10.0
libtpu: 0.0.40
codegen_flags: <defaults>
</compile_context>

<pallas_src>
import math
import functools

import jax
import jax.numpy as jnp
from jax import lax
from jax.experimental import pallas as pl
from jax.experimental.pallas import tpu as pltpu


# ----------------------------------------------------------------------------
# Tiling helper
# ----------------------------------------------------------------------------
def _pick_tile(m, target):
    """Row tile: full extent when small, else `target` (a multiple of 8).
    Grids use pl.cdiv(m, tile); the tail block is handled by masked writes."""
    return m if m <= target else target


# ----------------------------------------------------------------------------
# Generic fused / tiled dense-projection kernel (Q/K/V projections)
# ----------------------------------------------------------------------------
def _fused_linear_kernel(n, *refs):
    x_refs = refs[:n]
    w_refs = refs[n:2 * n]
    b_refs = refs[2 * n:3 * n]
    o_refs = refs[3 * n:]
    for x_ref, w_ref, b_ref, o_ref in zip(x_refs, w_refs, b_refs, o_refs):
        o_ref[...] = (
            jnp.dot(x_ref[...], w_ref[...], preferred_element_type=jnp.float32)
            + b_ref[...]
        ).astype(o_ref.dtype)


def _fused_linear(xs, ws, bs, *, tm_target=512):
    """Compute xs[i] @ ws[i] + bs[i] for all i in ONE pallas_call.

    All xs share the same (M, Din) shape. The row axis is tiled and pipelined
    ("parallel"); weights/biases stay resident in VMEM (pinned index_map)."""
    n = len(xs)
    M, Din = xs[0].shape
    douts = [w.shape[1] for w in ws]
    tm = _pick_tile(M, tm_target)
    grid = (pl.cdiv(M, tm),)

    in_specs = (
        [pl.BlockSpec((tm, Din), lambda i: (i, 0)) for _ in range(n)]
        + [pl.BlockSpec(w.shape, lambda i: (0, 0)) for w in ws]     # resident
        + [pl.BlockSpec((1, d), lambda i: (0, 0)) for d in douts]   # resident
    )
    out_specs = tuple(pl.BlockSpec((tm, d), lambda i: (i, 0)) for d in douts)
    out_shape = tuple(jax.ShapeDtypeStruct((M, d), jnp.float32) for d in douts)

    outs = pl.pallas_call(
        functools.partial(_fused_linear_kernel, n),
        out_shape=out_shape,
        grid_spec=pltpu.PrefetchScalarGridSpec(
            num_scalar_prefetch=0,
            grid=grid,
            in_specs=in_specs,
            out_specs=out_specs,
        ),
        compiler_params=pltpu.CompilerParams(
            dimension_semantics=("parallel",)),
    )(*xs, *ws, *[b.reshape(1, -1) for b in bs])
    return list(outs)


# ----------------------------------------------------------------------------
# Attention kernel (all heads batched) with the output projection fused in
# ----------------------------------------------------------------------------
def _attn_kernel(q_ref, k_ref, v_ref, wo_ref, bo_ref, out_ref, attn_ref, *,
                 scale):
    # q_ref: (1, H, tq, Dk); k_ref/v_ref: (1, H, Sk, Dk)
    # wo_ref: (H, Dk, D); bo_ref: (1, D)
    q = q_ref[0]          # (H, tq, Dk)
    k = k_ref[0]          # (H, Sk, Dk)
    v = v_ref[0]          # (H, Sk, Dk)

    # Scores for every head in one leading-dim batched contraction.
    s = jnp.einsum('hqd,hkd->hqk', q, k,
                   preferred_element_type=jnp.float32) * scale      # (H,tq,Sk)
    m = jnp.max(s, axis=-1, keepdims=True)
    p = jnp.exp(s - m)
    denom = jnp.sum(p, axis=-1, keepdims=True)
    attn = p / denom                                 # exact normalization
    attn_ref[0] = attn.astype(attn_ref.dtype)

    # Per-head context, still batched over the leading head dim.
    ctx = jnp.einsum('hqk,hkd->hqd', attn, v,
                     preferred_element_type=jnp.float32)            # (H,tq,Dk)

    # Fused output projection: merged-heads @ W_o == sum_h ctx_h @ W_o[h-rows].
    ctx_o = jnp.einsum('hqd,hde->hqe', ctx, wo_ref[...],
                       preferred_element_type=jnp.float32)          # (H,tq,D)
    out = jnp.sum(ctx_o, axis=0) + bo_ref[...]                      # (tq, D)
    out_ref[0] = out.astype(out_ref.dtype)          # one lane-dense store


def _attention_out(q, k, v, w_o_heads, b_o, d_k, *, tq_target=256):
    """q: (B, H, Sq, Dk); k, v: (B, H, Sk, Dk).

    Returns (output (B, Sq, D) — already through W_o/b_o,
             attn   (B, H, Sq, Sk))."""
    B, H, Sq, Dk = q.shape
    Sk = k.shape[2]
    D = H * Dk
    scale = 1.0 / math.sqrt(d_k)                 # baked in at trace time
    tq = _pick_tile(Sq, tq_target)
    grid = (B, pl.cdiv(Sq, tq))

    # Crude per-step VMEM estimate (f32, lane padding to 128), doubled for
    # pipelining; raises v5e's 16 MiB scoped default, stays under v7x's 64 MiB.
    lane = 128
    blk = 4 * (H * tq * lane + 2 * H * Sk * lane + H * tq * Sk
               + tq * max(D, lane) + H * Dk * max(D, lane) + lane)
    vmem_limit = int(min(60 * 1024 * 1024, max(32 * 1024 * 1024, 3 * blk)))

    kernel = functools.partial(_attn_kernel, scale=scale)
    out, attn = pl.pallas_call(
        kernel,
        out_shape=(
            jax.ShapeDtypeStruct((B, Sq, D), jnp.float32),
            jax.ShapeDtypeStruct((B, H, Sq, Sk), jnp.float32),
        ),
        grid_spec=pltpu.PrefetchScalarGridSpec(
            num_scalar_prefetch=0,
            grid=grid,
            in_specs=[
                pl.BlockSpec((1, H, tq, Dk), lambda b, i: (b, 0, i, 0)),
                pl.BlockSpec((1, H, Sk, Dk), lambda b, i: (b, 0, 0, 0)),
                pl.BlockSpec((1, H, Sk, Dk), lambda b, i: (b, 0, 0, 0)),
                pl.BlockSpec((H, Dk, D), lambda b, i: (0, 0, 0)),   # resident
                pl.BlockSpec((1, D), lambda b, i: (0, 0)),          # resident
            ],
            out_specs=(
                pl.BlockSpec((1, tq, D), lambda b, i: (b, i, 0)),
                pl.BlockSpec((1, H, tq, Sk), lambda b, i: (b, 0, i, 0)),
            ),
        ),
        compiler_params=pltpu.CompilerParams(
            dimension_semantics=("parallel", "parallel"),
            vmem_limit_bytes=vmem_limit),
    )(q, k, v, w_o_heads, b_o.reshape(1, -1))
    return out, attn


# ----------------------------------------------------------------------------
# MultiHeadAttention wrapper (mirrors the PyTorch module's forward)
# ----------------------------------------------------------------------------
class MultiHeadAttention:
    def __init__(self, d_model=64, num_heads=8, key=None):
        assert d_model % num_heads == 0
        self.d_model = d_model
        self.num_heads = num_heads
        self.d_k = d_model // num_heads
        if key is None:
            key = jax.random.PRNGKey(42)
        keys = jax.random.split(key, 8)
        bound = 1.0 / math.sqrt(d_model)   # nn.Linear default init range

        def init_w(k):
            # stored as (in_features, out_features); equivalent to torch W.T
            return jax.random.uniform(
                k, (d_model, d_model), jnp.float32, -bound, bound)

        def init_b(k):
            return jax.random.uniform(k, (d_model,), jnp.float32, -bound, bound)

        self.W_q, self.b_q = init_w(keys[0]), init_b(keys[1])
        self.W_k, self.b_k = init_w(keys[2]), init_b(keys[3])
        self.W_v, self.b_v = init_w(keys[4]), init_b(keys[5])
        self.W_o, self.b_o = init_w(keys[6]), init_b(keys[7])
        # Pre-concatenated weights for the self-attention fast path:
        # one (M, D) @ (D, 3D) wide-N matmul.
        self.W_qkv = jnp.concatenate([self.W_q, self.W_k, self.W_v], axis=1)
        self.b_qkv = jnp.concatenate([self.b_q, self.b_k, self.b_v], axis=0)
        # W_o reshaped so each head's rows are a leading-dim batch entry; used
        # by the fused attention+output-projection kernel.
        self.W_o_heads = self.W_o.reshape(num_heads, self.d_k, d_model)

    # -- projections -----------------------------------------------------
    def _project_qkv(self, q, k, v):
        B, Sq, D = q.shape
        Sk = k.shape[1]
        q2d = q.reshape(B * Sq, D)
        k2d = k.reshape(B * Sk, D)
        v2d = v.reshape(B * Sk, D)

        if q is k and k is v:
            # genuine self-attention: single wide-N matmul, slice columns after.
            # (identity check is a best-effort fast path; under jit tracing it
            # may fall back to the generic path — still correct.)
            (qkv,) = _fused_linear([q2d], [self.W_qkv], [self.b_qkv])
            q_p, k_p, v_p = qkv[:, :D], qkv[:, D:2 * D], qkv[:, 2 * D:]
        elif Sq == Sk:
            # one pallas_call computing all three projections per row tile
            q_p, k_p, v_p = _fused_linear(
                [q2d, k2d, v2d],
                [self.W_q, self.W_k, self.W_v],
                [self.b_q, self.b_k, self.b_v])
        else:
            (q_p,) = _fused_linear([q2d], [self.W_q], [self.b_q])
            k_p, v_p = _fused_linear([k2d, v2d],
                                     [self.W_k, self.W_v],
                                     [self.b_k, self.b_v])
        return (q_p.reshape(B, Sq, D),
                k_p.reshape(B, Sk, D),
                v_p.reshape(B, Sk, D))

    def _split_heads(self, x):
        B, S, _ = x.shape
        return jnp.transpose(
            x.reshape(B, S, self.num_heads, self.d_k), (0, 2, 1, 3))

    # -- forward ----------------------------------------------------------
    def __call__(self, q, k, v, use_cache=False, past_k=None, past_v=None):
        q_p, k_p, v_p = self._project_qkv(q, k, v)

        qh = self._split_heads(q_p)            # (B, H, Sq, Dk)
        kh = self._split_heads(k_p)            # (B, H, Sk, Dk)
        vh = self._split_heads(v_p)

        if use_cache and past_k is not None and past_v is not None:
            # Cache already lives in (B, H, S, Dk): concat directly, no relayout.
            kh = jnp.concatenate([past_k, kh], axis=2)
            vh = jnp.concatenate([past_v, vh], axis=2)

        # Attention + fused output projection in one kernel.
        output, attn = _attention_out(qh, kh, vh,
                                      self.W_o_heads, self.b_o, self.d_k)

        if use_cache:
            return output, attn, kh, vh
        return output, attn


# ----------------------------------------------------------------------------
# Reference (pure JAX, highest-precision matmuls) for sanity checks
# ----------------------------------------------------------------------------
def _ref_forward(mha, q, k, v):
    hp = lax.Precision.HIGHEST
    B, Sq, D = q.shape
    Sk = k.shape[1]

    def lin(x, w, b):
        return jnp.dot(x, w, precision=hp) + b

    qp = lin(q, mha.W_q, mha.b_q)
    kp = lin(k, mha.W_k, mha.b_k)
    vp = lin(v, mha.W_v, mha.b_v)
    sh = lambda x, S: jnp.transpose(
        x.reshape(B, S, mha.num_heads, mha.d_k), (0, 2, 1, 3))
    qh, kh, vh = sh(qp, Sq), sh(kp, Sk), sh(vp, Sk)
    scores = jnp.einsum("bhqd,bhkd->bhqk", qh, kh,
                        precision=hp) / math.sqrt(mha.d_k)
    attn = jax.nn.softmax(scores, axis=-1)
    ctx = jnp.einsum("bhqk,bhkd->bhqd", attn, vh, precision=hp)
    ctx = jnp.transpose(ctx, (0, 2, 1, 3)).reshape(B, Sq, D)
    out = lin(ctx, mha.W_o, mha.b_o)
    return out, attn


if __name__ == "__main__":
    d_model, num_heads = 64, 8
    batch, seq = 2, 8

    key = jax.random.PRNGKey(0)
    kq, kk, kv, kparams, kk2, kv2, kq2 = jax.random.split(key, 7)
    q = jax.random.normal(kq, (batch, seq, d_model), jnp.float32)
    k = jax.random.normal(kk, (batch, seq, d_model), jnp.float32)
    v = jax.random.normal(kv, (batch, seq, d_model), jnp.float32)

    mha = MultiHeadAttention(d_model=d_model, num_heads=num_heads, key=kparams)

    TOL = dict(atol=2e-3, rtol=2e-3)

    # --- cross-attention style call (distinct q / k / v) --------------------
    out, attn = mha(q, k, v)
    out = jax.block_until_ready(out)
    attn = jax.block_until_ready(attn)
    ref_out, ref_attn = _ref_forward(mha, q, k, v)
    assert out.shape == (batch, seq, d_model)
    assert attn.shape == (batch, num_heads, seq, seq)
    assert jnp.allclose(out, ref_out, **TOL)
    assert jnp.allclose(attn, ref_attn, **TOL)

    # --- true self-attention (exercises the fused (D, 3D) wide-N projection) -
    out_sa, attn_sa = mha(q, q, q)
    ref_out_sa, ref_attn_sa = _ref_forward(mha, q, q, q)
    assert jnp.allclose(out_sa, ref_out_sa, **TOL)
    assert jnp.allclose(attn_sa, ref_attn_sa, **TOL)

    # --- KV-cache path: cached call must equal the reference run over the
    #     concatenated key/value sequences -----------------------------------
    k_new = jax.random.normal(kk2, (batch, seq, d_model), jnp.float32)
    v_new = jax.random.normal(kv2, (batch, seq, d_model), jnp.float32)
    q_new = jax.random.normal(kq2, (batch, seq, d_model), jnp.float32)

    _, _, pk, pv = mha(q_new, k, v, use_cache=True)
    out_c, attn_c, pk2, pv2 = mha(q_new, k_new, v_new, use_cache=True,
                                  past_k=pk, past_v=pv)
    ref_out_c, ref_attn_c = _ref_forward(
        mha, q_new,
        jnp.concatenate([k, k_new], axis=1),
        jnp.concatenate([v, v_new], axis=1))
    assert pk2.shape == (batch, num_heads, 2 * seq, d_model // num_heads)
    assert pv2.shape == (batch, num_heads, 2 * seq, d_model // num_heads)
    assert attn_c.shape == (batch, num_heads, seq, 2 * seq)
    assert jnp.allclose(out_c, ref_out_c, **TOL)
    assert jnp.allclose(attn_c, ref_attn_c, **TOL)

    jax.block_until_ready(out_c)
    print("KERNEL_OK")
</pallas_src>

<mosaic_0001>
module attributes {stable_mosaic.version = 11 : i64} {
  func.func @_fused_linear_kernel(%arg0: i32, %arg1: memref<16x64xf32, #tpu.memory_space<vmem>>, %arg2: memref<16x64xf32, #tpu.memory_space<vmem>>, %arg3: memref<16x64xf32, #tpu.memory_space<vmem>>, %arg4: memref<64x64xf32, #tpu.memory_space<vmem>>, %arg5: memref<64x64xf32, #tpu.memory_space<vmem>>, %arg6: memref<64x64xf32, #tpu.memory_space<vmem>>, %arg7: memref<1x64xf32, #tpu.memory_space<vmem>>, %arg8: memref<1x64xf32, #tpu.memory_space<vmem>>, %arg9: memref<1x64xf32, #tpu.memory_space<vmem>>, %arg10: memref<16x64xf32, #tpu.memory_space<vmem>>, %arg11: memref<16x64xf32, #tpu.memory_space<vmem>>, %arg12: memref<16x64xf32, #tpu.memory_space<vmem>>) attributes {dimension_semantics = [#tpu.dimension_semantics<parallel>], iteration_bounds = array<i64: 1>, scalar_prefetch = 0 : i64, scratch_operands = 0 : i64, tpu.core_type = #tpu.core_type<tc>, window_params = [{transform_indices = @transform_0, window_bounds = array<i64: 16, 64>}, {transform_indices = @transform_1, window_bounds = array<i64: 16, 64>}, {transform_indices = @transform_2, window_bounds = array<i64: 16, 64>}, {pipeline_mode = #tpu.pipeline_mode<synchronous>, transform_indices = @transform_3, window_bounds = array<i64: 64, 64>}, {pipeline_mode = #tpu.pipeline_mode<synchronous>, transform_indices = @transform_4, window_bounds = array<i64: 64, 64>}, {pipeline_mode = #tpu.pipeline_mode<synchronous>, transform_indices = @transform_5, window_bounds = array<i64: 64, 64>}, {pipeline_mode = #tpu.pipeline_mode<synchronous>, transform_indices = @transform_6, window_bounds = array<i64: 1, 64>}, {pipeline_mode = #tpu.pipeline_mode<synchronous>, transform_indices = @transform_7, window_bounds = array<i64: 1, 64>}, {pipeline_mode = #tpu.pipeline_mode<synchronous>, transform_indices = @transform_8, window_bounds = array<i64: 1, 64>}, {transform_indices = @transform_9, window_bounds = array<i64: 16, 64>}, {transform_indices = @transform_10, window_bounds = array<i64: 16, 64>}, {transform_indices = @transform_11, window_bounds = array<i64: 16, 64>}]} {
    %c0 = arith.constant 0 : index
    %c0_0 = arith.constant 0 : index
    %0 = vector.load %arg1[%c0, %c0_0] : memref<16x64xf32, #tpu.memory_space<vmem>>, vector<16x64xf32>
    %c0_1 = arith.constant 0 : index
    %c0_2 = arith.constant 0 : index
    %1 = vector.load %arg4[%c0_1, %c0_2] : memref<64x64xf32, #tpu.memory_space<vmem>>, vector<64x64xf32>
    %cst = arith.constant dense<0.000000e+00> : vector<16x64xf32>
    %2 = tpu.matmul %0, %1, %cst {dimension_numbers = #tpu.dot_dimension_numbers<[1], [0], [0], [1], [0, 0, 1, 1], [], []>} : vector<16x64xf32>, vector<64x64xf32>, vector<16x64xf32> -> vector<16x64xf32>
    %c0_3 = arith.constant 0 : index
    %c0_4 = arith.constant 0 : index
    %3 = vector.load %arg7[%c0_3, %c0_4] : memref<1x64xf32, #tpu.memory_space<vmem>>, vector<1x64xf32>
    %4 = vector.broadcast %3 : vector<1x64xf32> to vector<16x64xf32>
    %5 = arith.addf %2, %4 : vector<16x64xf32>
    %c0_5 = arith.constant 0 : index
    %c0_6 = arith.constant 0 : index
    %6 = vector.load %arg10[%c0_5, %c0_6] : memref<16x64xf32, #tpu.memory_space<vmem>>, vector<16x64xf32>
    tpu.vector_store %arg10[%c0_5, %c0_6], %5 {strides = array<i32>} : memref<16x64xf32, #tpu.memory_space<vmem>>, vector<16x64xf32>,
    %c0_7 = arith.constant 0 : index
    %c0_8 = arith.constant 0 : index
    %7 = vector.load %arg2[%c0_7, %c0_8] : memref<16x64xf32, #tpu.memory_space<vmem>>, vector<16x64xf32>
    %c0_9 = arith.constant 0 : index
    %c0_10 = arith.constant 0 : index
    %8 = vector.load %arg5[%c0_9, %c0_10] : memref<64x64xf32, #tpu.memory_space<vmem>>, vector<64x64xf32>
    %cst_11 = arith.constant dense<0.000000e+00> : vector<16x64xf32>
    %9 = tpu.matmul %7, %8, %cst_11 {dimension_numbers = #tpu.dot_dimension_numbers<[1], [0], [0], [1], [0, 0, 1, 1], [], []>} : vector<16x64xf32>, vector<64x64xf32>, vector<16x64xf32> -> vector<16x64xf32>
    %c0_12 = arith.constant 0 : index
    %c0_13 = arith.constant 0 : index
    %10 = vector.load %arg8[%c0_12, %c0_13] : memref<1x64xf32, #tpu.memory_space<vmem>>, vector<1x64xf32>
    %11 = vector.broadcast %10 : vector<1x64xf32> to vector<16x64xf32>
    %12 = arith.addf %9, %11 : vector<16x64xf32>
    %c0_14 = arith.constant 0 : index
    %c0_15 = arith.constant 0 : index
    %13 = vector.load %arg11[%c0_14, %c0_15] : memref<16x64xf32, #tpu.memory_space<vmem>>, vector<16x64xf32>
    tpu.vector_store %arg11[%c0_14, %c0_15], %12 {strides = array<i32>} : memref<16x64xf32, #tpu.memory_space<vmem>>, vector<16x64xf32>,
    %c0_16 = arith.constant 0 : index
    %c0_17 = arith.constant 0 : index
    %14 = vector.load %arg3[%c0_16, %c0_17] : memref<16x64xf32, #tpu.memory_space<vmem>>, vector<16x64xf32>
    %c0_18 = arith.constant 0 : index
    %c0_19 = arith.constant 0 : index
    %15 = vector.load %arg6[%c0_18, %c0_19] : memref<64x64xf32, #tpu.memory_space<vmem>>, vector<64x64xf32>
    %cst_20 = arith.constant dense<0.000000e+00> : vector<16x64xf32>
    %16 = tpu.matmul %14, %15, %cst_20 {dimension_numbers = #tpu.dot_dimension_numbers<[1], [0], [0], [1], [0, 0, 1, 1], [], []>} : vector<16x64xf32>, vector<64x64xf32>, vector<16x64xf32> -> vector<16x64xf32>
    %c0_21 = arith.constant 0 : index
    %c0_22 = arith.constant 0 : index
    %17 = vector.load %arg9[%c0_21, %c0_22] : memref<1x64xf32, #tpu.memory_space<vmem>>, vector<1x64xf32>
    %18 = vector.broadcast %17 : vector<1x64xf32> to vector<16x64xf32>
    %19 = arith.addf %16, %18 : vector<16x64xf32>
    %c0_23 = arith.constant 0 : index
    %c0_24 = arith.constant 0 : index
    %20 = vector.load %arg12[%c0_23, %c0_24] : memref<16x64xf32, #tpu.memory_space<vmem>>, vector<16x64xf32>
    tpu.vector_store %arg12[%c0_23, %c0_24], %19 {strides = array<i32>} : memref<16x64xf32, #tpu.memory_space<vmem>>, vector<16x64xf32>,
    return
  }
  func.func @transform_0(%arg0: i32) -> (i32, i32) {
    %c0_i32 = arith.constant 0 : i32
    %c0_i32_0 = arith.constant 0 : i32
    return %arg0, %c0_i32 : i32, i32
  }
  func.func @transform_1(%arg0: i32) -> (i32, i32) {
    %c0_i32 = arith.constant 0 : i32
    %c0_i32_0 = arith.constant 0 : i32
    return %arg0, %c0_i32 : i32, i32
  }
  func.func @transform_2(%arg0: i32) -> (i32, i32) {
    %c0_i32 = arith.constant 0 : i32
    %c0_i32_0 = arith.constant 0 : i32
    return %arg0, %c0_i32 : i32, i32
  }
  func.func @transform_3(%arg0: i32) -> (i32, i32) {
    %c0_i32 = arith.constant 0 : i32
    %c0_i32_0 = arith.constant 0 : i32
    %c0_i32_1 = arith.constant 0 : i32
    return %c0_i32, %c0_i32_0 : i32, i32
  }
  func.func @transform_4(%arg0: i32) -> (i32, i32) {
    %c0_i32 = arith.constant 0 : i32
    %c0_i32_0 = arith.constant 0 : i32
    %c0_i32_1 = arith.constant 0 : i32
    return %c0_i32, %c0_i32_0 : i32, i32
  }
  func.func @transform_5(%arg0: i32) -> (i32, i32) {
    %c0_i32 = arith.constant 0 : i32
    %c0_i32_0 = arith.constant 0 : i32
    %c0_i32_1 = arith.constant 0 : i32
    return %c0_i32, %c0_i32_0 : i32, i32
  }
  func.func @transform_6(%arg0: i32) -> (i32, i32) {
    %c0_i32 = arith.constant 0 : i32
    %c0_i32_0 = arith.constant 0 : i32
    %c0_i32_1 = arith.constant 0 : i32
    return %c0_i32, %c0_i32_0 : i32, i32
  }
  func.func @transform_7(%arg0: i32) -> (i32, i32) {
    %c0_i32 = arith.constant 0 : i32
    %c0_i32_0 = arith.constant 0 : i32
    %c0_i32_1 = arith.constant 0 : i32
    return %c0_i32, %c0_i32_0 : i32, i32
  }
  func.func @transform_8(%arg0: i32) -> (i32, i32) {
    %c0_i32 = arith.constant 0 : i32
    %c0_i32_0 = arith.constant 0 : i32
    %c0_i32_1 = arith.constant 0 : i32
    return %c0_i32, %c0_i32_0 : i32, i32
  }
  func.func @transform_9(%arg0: i32) -> (i32, i32) {
    %c0_i32 = arith.constant 0 : i32
    %c0_i32_0 = arith.constant 0 : i32
    return %arg0, %c0_i32 : i32, i32
  }
  func.func @transform_10(%arg0: i32) -> (i32, i32) {
    %c0_i32 = arith.constant 0 : i32
    %c0_i32_0 = arith.constant 0 : i32
    return %arg0, %c0_i32 : i32, i32
  }
  func.func @transform_11(%arg0: i32) -> (i32, i32) {
    %c0_i32 = arith.constant 0 : i32
    %c0_i32_0 = arith.constant 0 : i32
    return %arg0, %c0_i32 : i32, i32
  }
}

</mosaic_0001>

<llo_original>
// kernel: tpu_custom_call.1
$region0: #{tpu_custom_call.1}
  #allocation0 [shape = 'u32[]', space=smem, size = 0x4, offset = 0x4, fixed_abs, tag = 'smem constant byte address 0x4 - core index']
  #allocation1 [shape = 'u32[144,128]{1,0:T(1,128)}', space=vmem, size = 0x12000, scoped, tag = 'internal scratch']
  %s0 = inlined_call_operand.hbm [shape: f32[16,64], index: 0, kind: input, shape index: {}]
  %s1 = inlined_call_operand.hbm [shape: f32[16,64], index: 1, kind: input, shape index: {}]
  %s2 = inlined_call_operand.hbm [shape: f32[16,64], index: 2, kind: input, shape index: {}]
  %s3 = inlined_call_operand.hbm [shape: f32[64,64], index: 3, kind: input, shape index: {}]
  %s4 = inlined_call_operand.hbm [shape: f32[64,64], index: 4, kind: input, shape index: {}]
  %s5 = inlined_call_operand.hbm [shape: f32[64,64], index: 5, kind: input, shape index: {}]
  %s6 = inlined_call_operand.vmem [shape: f32[1,64], index: 6, kind: input, shape index: {}]
  %s7 = inlined_call_operand.vmem [shape: f32[1,64], index: 7, kind: input, shape index: {}]
  %s8 = inlined_call_operand.vmem [shape: f32[1,64], index: 8, kind: input, shape index: {}]
  %s9 = inlined_call_operand.hbm [shape: f32[16,64], index: 9, kind: output, shape index: {0}]
  %s10 = inlined_call_operand.hbm [shape: f32[16,64], index: 10, kind: output, shape index: {1}]
  %s11 = inlined_call_operand.hbm [shape: f32[16,64], index: 11, kind: output, shape index: {2}]
  %12 = xla_tuple %s9, %s10, %s11
  %s13 = sld [smem:[#allocation0]]
  $region86: #{tpu_custom_call.1} parent=0
    _
  %s15 = ssub.s32 1, %s13
  %s16 = scalar_select 0, %s15, %s13
  $region1: #{tpu_custom_call.1} parent=0
    #allocation2 [shape = 'u8[8192]{0}', space=vmem, size = 0x2000, scoped, tag = 'input window, operand 0, single buffered']
    #allocation3 [shape = 's32[1]{0}', space=sflag, size = 0x4, scoped, tag = 'scoped memory for tpu_custom_call.1']
    #allocation4 [shape = 's32[1]{0}', space=sflag, size = 0x4, scoped, tag = 'scoped memory for tpu_custom_call.1']
    #allocation5 [shape = 'u8[8192]{0}', space=vmem, size = 0x2000, scoped, tag = 'input window, operand 1, single buffered']
    #allocation6 [shape = 's32[1]{0}', space=sflag, size = 0x4, scoped, tag = 'scoped memory for tpu_custom_call.1']
    #allocation7 [shape = 'u8[8192]{0}', space=vmem, size = 0x2000, scoped, tag = 'input window, operand 2, single buffered']
    #allocation8 [shape = 'u8[32768]{0}', space=vmem, size = 0x8000, scoped, tag = 'input window, operand 3, single buffered']
    #allocation9 [shape = 's32[1]{0}', space=sflag, size = 0x4, scoped, tag = 'scoped memory for tpu_custom_call.1']
    #allocation10 [shape = 'u8[32768]{0}', space=vmem, size = 0x8000, scoped, tag = 'input window, operand 4, single buffered']
    #allocation11 [shape = 'u8[32768]{0}', space=vmem, size = 0x8000, scoped, tag = 'input window, operand 5, single buffered']
    #allocation12 [shape = 's32[1]{0}', space=sflag, size = 0x4, scoped, tag = 'scoped memory for tpu_custom_call.1']
    #allocation13 [shape = 'u8[8192]{0}', space=vmem, size = 0x2000, scoped, tag = 'output window, operand 0, single buffered']
    #allocation14 [shape = 'u8[8192]{0}', space=vmem, size = 0x2000, scoped, tag = 'output window, operand 1, single buffered']
    #allocation15 [shape = 's32[1]{0}', space=sflag, size = 0x4, scoped, tag = 'scoped memory for tpu_custom_call.1']
    #allocation16 [shape = 'u8[8192]{0}', space=vmem, size = 0x2000, scoped, tag = 'output window, operand 2, single buffered']
    %17 = vsyncpa [#allocation3], 0
    %18 = vsyncpa [#allocation6], 0
    %19 = vsyncpa [#allocation9], 0
    %20 = vsyncpa [#allocation12], 0
    %21 = vsyncpa [#allocation4], 0
    %22 = vsyncpa [#allocation15], 0
    // Predicated region
    $region2: #{tpu_custom_call.1} parent=1 // pred_check
      _
    $region3: #{tpu_custom_call.1} parent=1 // pred_check_branch
      %24 = sbr.rel (0) target = $region5
    $region4: #{tpu_custom_call.1} parent=1 // pred_region
      %s26 = ssub.s32 256, 256
      %27 = vsyncadd [#allocation3], %s26
      %s28 = sshll.u32 [#allocation2], 4
      %s29 = int_to_ptr.vmem [resolvable:$true] %s28
      %34 = dma.hbm_to_vmem [thread:$0]  %s0, 256, %s29, [#allocation3], 128, 128, 8
    $region5: #{tpu_custom_call.1} parent=1 // pred_fallthru
      _
    // Predicated region
    $region6: #{tpu_custom_call.1} parent=1 // pred_check
      _
    $region7: #{tpu_custom_call.1} parent=1 // pred_check_branch
      %36 = sbr.rel (0) target = $region9
    $region8: #{tpu_custom_call.1} parent=1 // pred_region
      %s38 = ssub.s32 256, 256
      %39 = vsyncadd [#allocation6], %s38
      %s40 = sshll.u32 [#allocation5], 4
      %s41 = int_to_ptr.vmem [resolvable:$true] %s40
      %46 = dma.hbm_to_vmem [thread:$0]  %s1, 256, %s41, [#allocation6], 128, 128, 8
    $region9: #{tpu_custom_call.1} parent=1 // pred_fallthru
      _
    // Predicated region
    $region10: #{tpu_custom_call.1} parent=1 // pred_check
      _
    $region11: #{tpu_custom_call.1} parent=1 // pred_check_branch
      %48 = sbr.rel (0) target = $region13
    $region12: #{tpu_custom_call.1} parent=1 // pred_region
      %s50 = ssub.s32 256, 256
      %51 = vsyncadd [#allocation6], %s50
      %s52 = sshll.u32 [#allocation7], 4
      %s53 = int_to_ptr.vmem [resolvable:$true] %s52
      %58 = dma.hbm_to_vmem [thread:$0]  %s2, 256, %s53, [#allocation6], 128, 128, 8
    $region13: #{tpu_custom_call.1} parent=1 // pred_fallthru
      _
    // Predicated region
    $region14: #{tpu_custom_call.1} parent=1 // pred_check
      _
    $region15: #{tpu_custom_call.1} parent=1 // pred_check_branch
      %60 = sbr.rel (0) target = $region17
    $region16: #{tpu_custom_call.1} parent=1 // pred_region
      %s62 = ssub.s32 1024, 1024
      %63 = vsyncadd [#allocation9], %s62
      %s64 = sshll.u32 [#allocation8], 4
      %s65 = int_to_ptr.vmem [resolvable:$true] %s64
      %70 = dma.hbm_to_vmem [thread:$0]  %s3, 1024, %s65, [#allocation9], 128, 128, 8
    $region17: #{tpu_custom_call.1} parent=1 // pred_fallthru
      _
    // Predicated region
    $region18: #{tpu_custom_call.1} parent=1 // pred_check
      _
    $region19: #{tpu_custom_call.1} parent=1 // pred_check_branch
      %72 = sbr.rel (0) target = $region21
    $region20: #{tpu_custom_call.1} parent=1 // pred_region
      %s74 = ssub.s32 1024, 1024
      %75 = vsyncadd [#allocation9], %s74
      %s76 = sshll.u32 [#allocation10], 4
      %s77 = int_to_ptr.vmem [resolvable:$true] %s76
      %82 = dma.hbm_to_vmem [thread:$0]  %s4, 1024, %s77, [#allocation9], 128, 128, 8
    $region21: #{tpu_custom_call.1} parent=1 // pred_fallthru
      _
    // Predicated region
    $region22: #{tpu_custom_call.1} parent=1 // pred_check
      _
    $region23: #{tpu_custom_call.1} parent=1 // pred_check_branch
      %84 = sbr.rel (0) target = $region25
    $region24: #{tpu_custom_call.1} parent=1 // pred_region
      %s86 = ssub.s32 1024, 1024
      %87 = vsyncadd [#allocation12], %s86
      %s88 = sshll.u32 [#allocation11], 4
      %s89 = int_to_ptr.vmem [resolvable:$true] %s88
      %94 = dma.hbm_to_vmem [thread:$0]  %s5, 1024, %s89, [#allocation12], 128, 128, 8
    $region25: #{tpu_custom_call.1} parent=1 // pred_fallthru
      _
    // Predicated region
    $region26: #{tpu_custom_call.1} parent=1 // pred_check
      _
    $region27: #{tpu_custom_call.1} parent=1 // pred_check_branch
      %96 = sbr.rel (0) target = $region29
    $region28: #{tpu_custom_call.1} parent=1 // pred_region
      _
    $region29: #{tpu_custom_call.1} parent=1 // pred_fallthru
      _
    // Predicated region
    $region30: #{tpu_custom_call.1} parent=1 // pred_check
      _
    $region31: #{tpu_custom_call.1} parent=1 // pred_check_branch
      %98 = sbr.rel (0) target = $region33
    $region32: #{tpu_custom_call.1} parent=1 // pred_region
      _
    $region33: #{tpu_custom_call.1} parent=1 // pred_fallthru
      _
    // Predicated region
    $region34: #{tpu_custom_call.1} parent=1 // pred_check
      _
    $region35: #{tpu_custom_call.1} parent=1 // pred_check_branch
      %100 = sbr.rel (0) target = $region37
    $region36: #{tpu_custom_call.1} parent=1 // pred_region
      _
    $region37: #{tpu_custom_call.1} parent=1 // pred_fallthru
      _
    // Predicated region
    $region38: #{tpu_custom_call.1} parent=1 // pred_check
      _
    $region39: #{tpu_custom_call.1} parent=1 // pred_check_branch
      %102 = sbr.rel (0) target = $region41
    $region40: #{tpu_custom_call.1} parent=1 // pred_region
      %103 = dma.done [#allocation3], 256
    $region41: #{tpu_custom_call.1} parent=1 // pred_fallthru
      _
    // Predicated region
    $region42: #{tpu_custom_call.1} parent=1 // pred_check
      _
    $region43: #{tpu_custom_call.1} parent=1 // pred_check_branch
      %105 = sbr.rel (0) target = $region45
    $region44: #{tpu_custom_call.1} parent=1 // pred_region
      %106 = dma.done [#allocation6], 256
    $region45: #{tpu_custom_call.1} parent=1 // pred_fallthru
      _
    // Predicated region
    $region46: #{tpu_custom_call.1} parent=1 // pred_check
      _
    $region47: #{tpu_custom_call.1} parent=1 // pred_check_branch
      %108 = sbr.rel (0) target = $region49
    $region48: #{tpu_custom_call.1} parent=1 // pred_region
      %109 = dma.done [#allocation6], 256
    $region49: #{tpu_custom_call.1} parent=1 // pred_fallthru
      _
    // Predicated region
    $region50: #{tpu_custom_call.1} parent=1 // pred_check
      _
    $region51: #{tpu_custom_call.1} parent=1 // pred_check_branch
      %111 = sbr.rel (0) target = $region53
    $region52: #{tpu_custom_call.1} parent=1 // pred_region
      %112 = dma.done [#allocation9], 1024
    $region53: #{tpu_custom_call.1} parent=1 // pred_fallthru
      _
    // Predicated region
    $region54: #{tpu_custom_call.1} parent=1 // pred_check
      _
    $region55: #{tpu_custom_call.1} parent=1 // pred_check_branch
      %114 = sbr.rel (0) target = $region57
    $region56: #{tpu_custom_call.1} parent=1 // pred_region
      %115 = dma.done [#allocation9], 1024
    $region57: #{tpu_custom_call.1} parent=1 // pred_fallthru
      _
    // Predicated region
    $region58: #{tpu_custom_call.1} parent=1 // pred_check
      _
    $region59: #{tpu_custom_call.1} parent=1 // pred_check_branch
      %117 = sbr.rel (0) target = $region61
    $region60: #{tpu_custom_call.1} parent=1 // pred_region
      %118 = dma.done [#allocation12], 1024
    $region61: #{tpu_custom_call.1} parent=1 // pred_fallthru
      _
    %v119 = vld [vmem:[#allocation2] sm:$0xff]
    %v120 = vld [vmem:[#allocation2 + $0x8] sm:$0xff]
    %v121 = vld [vmem:[#allocation8] sm:$0xff]
    %v122 = vld [vmem:[#allocation8 + $0x8] sm:$0xff]
    %v123 = vld [vmem:[#allocation8 + $0x10] sm:$0xff]
    %v124 = vld [vmem:[#allocation8 + $0x18] sm:$0xff]
    %v125 = vld [vmem:[#allocation8 + $0x20] sm:$0xff]
    %v126 = vld [vmem:[#allocation8 + $0x28] sm:$0xff]
    %v127 = vld [vmem:[#allocation8 + $0x30] sm:$0xff]
    %v128 = vld [vmem:[#allocation8 + $0x38] sm:$0xff]
    %v129 = vld [vmem:[%s6] sm:$0x1]
    %v131 = vlaneseq
    %v132 = vshrl.u32 %v131, 7
    %v133 = vsub.s32 0, %v132
    %v134 = vrot.slane %v129, %v133
    %vm136 = vcmask 523264
    %v138 = vsel %vm136, %v119, 0
    %v141 = vsel %vm136, %v120, 0
    %143 = vmatprep.subr.mxu0 0.0
    %144 = vmatpush1.msra.mxu0 %v121
    %145 = vmatprep.subr.mxu0 0.0
    %146 = vmatpush1.msra.mxu0 %v122
    %147 = vmatprep.subr.mxu0 0.0
    %148 = vmatpush1.msra.mxu0 %v123
    %149 = vmatprep.subr.mxu0 0.0
    %150 = vmatpush1.msra.mxu0 %v124
    %151 = vmatprep.subr.mxu0 0.0
    %152 = vmatpush1.msra.mxu0 %v125
    %153 = vmatprep.subr.mxu0 0.0
    %154 = vmatpush1.msra.mxu0 %v126
    %155 = vmatprep.subr.mxu0 0.0
    %156 = vmatpush1.msra.mxu0 %v127
    %157 = vmatprep.subr.mxu0 0.0
    %158 = vmatpush1.msra.mxu0 %v128
    %159 = vmatprep.subr.mxu0 0.0
    %160 = vmatpush1.msra.mxu0 0.0
    %161 = vmatprep.subr.mxu0 0.0
    %162 = vmatpush1.msra.mxu0 0.0
    %163 = vmatprep.subr.mxu0 0.0
    %164 = vmatpush1.msra.mxu0 0.0
    %165 = vmatprep.subr.mxu0 0.0
    %166 = vmatpush1.msra.mxu0 0.0
    %167 = vmatprep.subr.mxu0 0.0
    %168 = vmatpush1.msra.mxu0 0.0
    %169 = vmatprep.subr.mxu0 0.0
    %170 = vmatpush1.msra.mxu0 0.0
    %171 = vmatprep.subr.mxu0 0.0
    %172 = vmatpush1.msra.mxu0 0.0
    %173 = vmatprep.subr.mxu0 0.0
    %174 = vmatpush1.msra.mxu0 0.0
    %175 = vmatprep.subr.mxu0 0.0
    %176 = vmatpush1.msra.mxu0 0.0
    %177 = vmatprep.subr.mxu0 0.0
    %178 = vmatpush1.msra.mxu0 0.0
    %179 = vmatprep.subr.mxu0 0.0
    %180 = vmatpush1.msra.mxu0 0.0
    %181 = vmatprep.subr.mxu0 0.0
    %182 = vmatpush1.msra.mxu0 0.0
    %183 = vmatprep.subr.mxu0 0.0
    %184 = vmatpush1.msra.mxu0 0.0
    %185 = vmatprep.subr.mxu0 0.0
    %186 = vmatpush1.msra.mxu0 0.0
    %187 = vmatprep.subr.mxu0 0.0
    %188 = vmatpush1.msra.mxu0 0.0
    %189 = vmatprep.subr.mxu0 0.0
    %190 = vmatpush1.msra.mxu0 0.0
    %191 = vmatprep.subr.mxu0 0.0
    %192 = vmatpush1.msra.mxu0 0.0
    %193 = vmatprep.subr.mxu0 0.0
    %194 = vmatpush1.msra.mxu0 0.0
    %195 = vmatprep.subr.mxu0 0.0
    %196 = vmatpush1.msra.mxu0 0.0
    %197 = vmatprep.subr.mxu0 0.0
    %198 = vmatpush1.msra.mxu0 0.0
    %199 = vmatprep.subr.mxu0 0.0
    %200 = vmatpush1.msra.mxu0 0.0
    %201 = vmatprep.subr.mxu0 0.0
    %202 = vmatpush1.msra.mxu0 0.0
    %203 = vmatprep.subr.mxu0 0.0
    %204 = vmatpush1.msra.mxu0 0.0
    %205 = vmatprep.subr.mxu0 0.0
    %206 = vmatpush1.msra.mxu0 0.0
    %207 = vmatprep.mubr.f32.mxu0 0.0
    %208 = vmatmul.mubr.f32.gmra.mrb[0].mxu0 %v138
    %v209 = vpop.f32.mrb[0].mxu0
    %v210 = vadd.f32 %v134, %v209
    %v211 = vpop.f32.mrb[0].mxu0
    %212 = vmatprep.mubr.f32.mxu0 0.0
    %213 = vmatmul.mubr.f32.gmra.mrb[0].mxu0 %v141
    %v214 = vpop.f32.mrb[0].mxu0
    %v215 = vadd.f32 %v134, %v214
    %v216 = vpop.f32.mrb[0].mxu0
    %217 = vdwg.mxu0
    %218 = vst.msk [vmem:[#allocation13] sm:$0xff] %vm136, %v210
    %219 = vst.msk [vmem:[#allocation13 + $0x8] sm:$0xff] %vm136, %v215
    %v220 = vld [vmem:[#allocation5] sm:$0xff]
    %v221 = vld [vmem:[#allocation5 + $0x8] sm:$0xff]
    %v222 = vld [vmem:[#allocation10] sm:$0xff]
    %v223 = vld [vmem:[#allocation10 + $0x8] sm:$0xff]
    %v224 = vld [vmem:[#allocation10 + $0x10] sm:$0xff]
    %v225 = vld [vmem:[#allocation10 + $0x18] sm:$0xff]
    %v226 = vld [vmem:[#allocation10 + $0x20] sm:$0xff]
    %v227 = vld [vmem:[#allocation10 + $0x28] sm:$0xff]
    %v228 = vld [vmem:[#allocation10 + $0x30] sm:$0xff]
    %v229 = vld [vmem:[#allocation10 + $0x38] sm:$0xff]
    %v230 = vld [vmem:[%s7] sm:$0x1]
    %v232 = vlaneseq
    %v233 = vshrl.u32 %v232, 7
    %v234 = vsub.s32 0, %v233
    %v235 = vrot.slane %v230, %v234
    %v238 = vsel %vm136, %v220, 0
    %v241 = vsel %vm136, %v221, 0
    %243 = vmatprep.subr.mxu0 0.0
    %244 = vmatpush1.msra.mxu0 %v222
    %245 = vmatprep.subr.mxu0 0.0
    %246 = vmatpush1.msra.mxu0 %v223
    %247 = vmatprep.subr.mxu0 0.0
    %248 = vmatpush1.msra.mxu0 %v224
    %249 = vmatprep.subr.mxu0 0.0
    %250 = vmatpush1.msra.mxu0 %v225
    %251 = vmatprep.subr.mxu0 0.0
    %252 = vmatpush1.msra.mxu0 %v226
    %253 = vmatprep.subr.mxu0 0.0
    %254 = vmatpush1.msra.mxu0 %v227
    %255 = vmatprep.subr.mxu0 0.0
    %256 = vmatpush1.msra.mxu0 %v228
    %257 = vmatprep.subr.mxu0 0.0
    %258 = vmatpush1.msra.mxu0 %v229
    %259 = vmatprep.subr.mxu0 0.0
    %260 = vmatpush1.msra.mxu0 0.0
    %261 = vmatprep.subr.mxu0 0.0
    %262 = vmatpush1.msra.mxu0 0.0
    %263 = vmatprep.subr.mxu0 0.0
    %264 = vmatpush1.msra.mxu0 0.0
    %265 = vmatprep.subr.mxu0 0.0
    %266 = vmatpush1.msra.mxu0 0.0
    %267 = vmatprep.subr.mxu0 0.0
    %268 = vmatpush1.msra.mxu0 0.0
    %269 = vmatprep.subr.mxu0 0.0
    %270 = vmatpush1.msra.mxu0 0.0
    %271 = vmatprep.subr.mxu0 0.0
    %272 = vmatpush1.msra.mxu0 0.0
    %273 = vmatprep.subr.mxu0 0.0
    %274 = vmatpush1.msra.mxu0 0.0
    %275 = vmatprep.subr.mxu0 0.0
    %276 = vmatpush1.msra.mxu0 0.0
    %277 = vmatprep.subr.mxu0 0.0
    %278 = vmatpush1.msra.mxu0 0.0
    %279 = vmatprep.subr.mxu0 0.0
    %280 = vmatpush1.msra.mxu0 0.0
    %281 = vmatprep.subr.mxu0 0.0
    %282 = vmatpush1.msra.mxu0 0.0
    %283 = vmatprep.subr.mxu0 0.0
    %284 = vmatpush1.msra.mxu0 0.0
    %285 = vmatprep.subr.mxu0 0.0
    %286 = vmatpush1.msra.mxu0 0.0
    %287 = vmatprep.subr.mxu0 0.0
    %288 = vmatpush1.msra.mxu0 0.0
    %289 = vmatprep.subr.mxu0 0.0
    %290 = vmatpush1.msra.mxu0 0.0
    %291 = vmatprep.subr.mxu0 0.0
    %292 = vmatpush1.msra.mxu0 0.0
    %293 = vmatprep.subr.mxu0 0.0
    %294 = vmatpush1.msra.mxu0 0.0
    %295 = vmatprep.subr.mxu0 0.0
    %296 = vmatpush1.msra.mxu0 0.0
    %297 = vmatprep.subr.mxu0 0.0
    %298 = vmatpush1.msra.mxu0 0.0
    %299 = vmatprep.subr.mxu0 0.0
    %300 = vmatpush1.msra.mxu0 0.0
    %301 = vmatprep.subr.mxu0 0.0
    %302 = vmatpush1.msra.mxu0 0.0
    %303 = vmatprep.subr.mxu0 0.0
    %304 = vmatpush1.msra.mxu0 0.0
    %305 = vmatprep.subr.mxu0 0.0
    %306 = vmatpush1.msra.mxu0 0.0
    %307 = vmatprep.mubr.f32.mxu0 0.0
    %308 = vmatmul.mubr.f32.gmra.mrb[0].mxu0 %v238
    %v309 = vpop.f32.mrb[0].mxu0
    %v310 = vadd.f32 %v235, %v309
    %v311 = vpop.f32.mrb[0].mxu0
    %312 = vmatprep.mubr.f32.mxu0 0.0
    %313 = vmatmul.mubr.f32.gmra.mrb[0].mxu0 %v241
    %v314 = vpop.f32.mrb[0].mxu0
    %v315 = vadd.f32 %v235, %v314
    %v316 = vpop.f32.mrb[0].mxu0
    %317 = vdwg.mxu0
    %318 = vst.msk [vmem:[#allocation14] sm:$0xff] %vm136, %v310
    %319 = vst.msk [vmem:[#allocation14 + $0x8] sm:$0xff] %vm136, %v315
    %v320 = vld [vmem:[#allocation7] sm:$0xff]
    %v321 = vld [vmem:[#allocation7 + $0x8] sm:$0xff]
    %v322 = vld [vmem:[#allocation11] sm:$0xff]
    %v323 = vld [vmem:[#allocation11 + $0x8] sm:$0xff]
    %v324 = vld [vmem:[#allocation11 + $0x10] sm:$0xff]
    %v325 = vld [vmem:[#allocation11 + $0x18] sm:$0xff]
    %v326 = vld [vmem:[#allocation11 + $0x20] sm:$0xff]
    %v327 = vld [vmem:[#allocation11 + $0x28] sm:$0xff]
    %v328 = vld [vmem:[#allocation11 + $0x30] sm:$0xff]
    %v329 = vld [vmem:[#allocation11 + $0x38] sm:$0xff]
    %v330 = vld [vmem:[%s8] sm:$0x1]
    %v332 = vlaneseq
    %v333 = vshrl.u32 %v332, 7
    %v334 = vsub.s32 0, %v333
    %v335 = vrot.slane %v330, %v334
    %v338 = vsel %vm136, %v320, 0
    %v341 = vsel %vm136, %v321, 0
    %343 = vmatprep.subr.mxu0 0.0
    %344 = vmatpush1.msra.mxu0 %v322
    %345 = vmatprep.subr.mxu0 0.0
    %346 = vmatpush1.msra.mxu0 %v323
    %347 = vmatprep.subr.mxu0 0.0
    %348 = vmatpush1.msra.mxu0 %v324
    %349 = vmatprep.subr.mxu0 0.0
    %350 = vmatpush1.msra.mxu0 %v325
    %351 = vmatprep.subr.mxu0 0.0
    %352 = vmatpush1.msra.mxu0 %v326
    %353 = vmatprep.subr.mxu0 0.0
    %354 = vmatpush1.msra.mxu0 %v327
    %355 = vmatprep.subr.mxu0 0.0
    %356 = vmatpush1.msra.mxu0 %v328
    %357 = vmatprep.subr.mxu0 0.0
    %358 = vmatpush1.msra.mxu0 %v329
    %359 = vmatprep.subr.mxu0 0.0
    %360 = vmatpush1.msra.mxu0 0.0
    %361 = vmatprep.subr.mxu0 0.0
    %362 = vmatpush1.msra.mxu0 0.0
    %363 = vmatprep.subr.mxu0 0.0
    %364 = vmatpush1.msra.mxu0 0.0
    %365 = vmatprep.subr.mxu0 0.0
    %366 = vmatpush1.msra.mxu0 0.0
    %367 = vmatprep.subr.mxu0 0.0
    %368 = vmatpush1.msra.mxu0 0.0
    %369 = vmatprep.subr.mxu0 0.0
    %370 = vmatpush1.msra.mxu0 0.0
    %371 = vmatprep.subr.mxu0 0.0
    %372 = vmatpush1.msra.mxu0 0.0
    %373 = vmatprep.subr.mxu0 0.0
    %374 = vmatpush1.msra.mxu0 0.0
    %375 = vmatprep.subr.mxu0 0.0
    %376 = vmatpush1.msra.mxu0 0.0
    %377 = vmatprep.subr.mxu0 0.0
    %378 = vmatpush1.msra.mxu0 0.0
    %379 = vmatprep.subr.mxu0 0.0
    %380 = vmatpush1.msra.mxu0 0.0
    %381 = vmatprep.subr.mxu0 0.0
    %382 = vmatpush1.msra.mxu0 0.0
    %383 = vmatprep.subr.mxu0 0.0
    %384 = vmatpush1.msra.mxu0 0.0
    %385 = vmatprep.subr.mxu0 0.0
    %386 = vmatpush1.msra.mxu0 0.0
    %387 = vmatprep.subr.mxu0 0.0
    %388 = vmatpush1.msra.mxu0 0.0
    %389 = vmatprep.subr.mxu0 0.0
    %390 = vmatpush1.msra.mxu0 0.0
    %391 = vmatprep.subr.mxu0 0.0
    %392 = vmatpush1.msra.mxu0 0.0
    %393 = vmatprep.subr.mxu0 0.0
    %394 = vmatpush1.msra.mxu0 0.0
    %395 = vmatprep.subr.mxu0 0.0
    %396 = vmatpush1.msra.mxu0 0.0
    %397 = vmatprep.subr.mxu0 0.0
    %398 = vmatpush1.msra.mxu0 0.0
    %399 = vmatprep.subr.mxu0 0.0
    %400 = vmatpush1.msra.mxu0 0.0
    %401 = vmatprep.subr.mxu0 0.0
    %402 = vmatpush1.msra.mxu0 0.0
    %403 = vmatprep.subr.mxu0 0.0
    %404 = vmatpush1.msra.mxu0 0.0
    %405 = vmatprep.subr.mxu0 0.0
    %406 = vmatpush1.msra.mxu0 0.0
    %407 = vmatprep.mubr.f32.mxu0 0.0
    %408 = vmatmul.mubr.f32.gmra.mrb[0].mxu0 %v338
    %v409 = vpop.f32.mrb[0].mxu0
    %v410 = vadd.f32 %v335, %v409
    %v411 = vpop.f32.mrb[0].mxu0
    %412 = vmatprep.mubr.f32.mxu0 0.0
    %413 = vmatmul.mubr.f32.gmra.mrb[0].mxu0 %v341
    %v414 = vpop.f32.mrb[0].mxu0
    %v415 = vadd.f32 %v335, %v414
    %v416 = vpop.f32.mrb[0].mxu0
    %417 = vdwg.mxu0
    %418 = vst.msk [vmem:[#allocation16] sm:$0xff] %vm136, %v410
    %419 = vst.msk [vmem:[#allocation16 + $0x8] sm:$0xff] %vm136, %v415
    // Predicated region
    $region62: #{tpu_custom_call.1} parent=1 // pred_check
      _
    $region63: #{tpu_custom_call.1} parent=1 // pred_check_branch
      %421 = sbr.rel (0) target = $region65
    $region64: #{tpu_custom_call.1} parent=1 // pred_region
      %s423 = ssub.s32 256, 256
      %424 = vsyncadd [#allocation4], %s423
      %s425 = sshll.u32 [#allocation13], 4
      %s426 = int_to_ptr.vmem [resolvable:$true] %s425
      %431 = dma.vmem_to_hbm [thread:$0]  %s426, 256, %s9, [#allocation4], 128, 128, 8
    $region65: #{tpu_custom_call.1} parent=1 // pred_fallthru
      _
    // Predicated region
    $region66: #{tpu_custom_call.1} parent=1 // pred_check
      _
    $region67: #{tpu_custom_call.1} parent=1 // pred_check_branch
      %433 = sbr.rel (0) target = $region69
    $region68: #{tpu_custom_call.1} parent=1 // pred_region
      %s435 = ssub.s32 256, 256
      %436 = vsyncadd [#allocation15], %s435
      %s437 = sshll.u32 [#allocation14], 4
      %s438 = int_to_ptr.vmem [resolvable:$true] %s437
      %443 = dma.vmem_to_hbm [thread:$0]  %s438, 256, %s10, [#allocation15], 128, 128, 8
    $region69: #{tpu_custom_call.1} parent=1 // pred_fallthru
      _
    // Predicated region
    $region70: #{tpu_custom_call.1} parent=1 // pred_check
      _
    $region71: #{tpu_custom_call.1} parent=1 // pred_check_branch
      %445 = sbr.rel (0) target = $region73
    $region72: #{tpu_custom_call.1} parent=1 // pred_region
      %s447 = ssub.s32 256, 256
      %448 = vsyncadd [#allocation15], %s447
      %s449 = sshll.u32 [#allocation16], 4
      %s450 = int_to_ptr.vmem [resolvable:$true] %s449
      %455 = dma.vmem_to_hbm [thread:$0]  %s450, 256, %s11, [#allocation15], 128, 128, 8
    $region73: #{tpu_custom_call.1} parent=1 // pred_fallthru
      _
    // Predicated region
    $region74: #{tpu_custom_call.1} parent=1 // pred_check
      _
    $region75: #{tpu_custom_call.1} parent=1 // pred_check_branch
      %457 = sbr.rel (0) target = $region77
    $region76: #{tpu_custom_call.1} parent=1 // pred_region
      %458 = dma.done [#allocation4], 256
    $region77: #{tpu_custom_call.1} parent=1 // pred_fallthru
      _
    // Predicated region
    $region78: #{tpu_custom_call.1} parent=1 // pred_check
      _
    $region79: #{tpu_custom_call.1} parent=1 // pred_check_branch
      %460 = sbr.rel (0) target = $region81
    $region80: #{tpu_custom_call.1} parent=1 // pred_region
      %461 = dma.done [#allocation15], 256
    $region81: #{tpu_custom_call.1} parent=1 // pred_fallthru
      _
    // Predicated region
    $region82: #{tpu_custom_call.1} parent=1 // pred_check
      _
    $region83: #{tpu_custom_call.1} parent=1 // pred_check_branch
      %463 = sbr.rel (0) target = $region85
    $region84: #{tpu_custom_call.1} parent=1 // pred_region
      %464 = dma.done [#allocation15], 256
    $region85: #{tpu_custom_call.1} parent=1 // pred_fallthru
      _
    %465 = vsyncpa [#allocation3], 1
    %466 = vsyncpa [#allocation6], 1
    %467 = vsyncpa [#allocation9], 1
    %468 = vsyncpa [#allocation12], 1
    %469 = vsyncpa [#allocation4], 1
    %470 = vsyncpa [#allocation15], 1

</llo_original>
